<compile_context>
chip_gen: v7x
topology: tpu7x:2x2x1
jax: 0.10.0
libtpu: 0.0.40
codegen_flags: <defaults>
</compile_context>

<pallas_src>
import functools

import jax
import jax.numpy as jnp
from jax.experimental import pallas as pl
from jax.experimental.pallas import tpu as pltpu


def _pair(v):
    return (v, v) if isinstance(v, int) else tuple(v)


def _quadruple(v):
    return (v,) * 4 if isinstance(v, int) else tuple(v)


def _same_padding(ih, iw, k, stride):
    # mirrors MedianPool2d._padding with same=True
    if ih % stride[0] == 0:
        ph = max(k[0] - stride[0], 0)
    else:
        ph = max(k[0] - ih % stride[0], 0)
    if iw % stride[1] == 0:
        pw = max(k[1] - stride[1], 0)
    else:
        pw = max(k[1] - iw % stride[1], 0)
    p_l = pw // 2
    p_r = pw - p_l
    p_t = ph // 2
    p_b = ph - p_t
    return p_l, p_r, p_t, p_b


def _med3(a, b, c):
    """Elementwise median of three arrays (4 min/max ops)."""
    return jnp.maximum(jnp.minimum(a, b), jnp.minimum(jnp.maximum(a, b), c))


def _median_pool_kernel(xw_ref, o_ref):
    """3x3 stride-1 median filter on a lane-folded padded block.

    xw_ref: (TB, Hp, GWp) padded block, G images folded along the lane axis
            (each image occupies a Wp-wide lane segment, Wp = Wo + 2).
    o_ref:  (TB, Ho, GWp) output block; only the first Wo columns of each
            Wp-wide segment are meaningful (the wrapper discards the rest).
    """
    Ho = o_ref.shape[1]
    GWp = o_ref.shape[2]
    Wv = GWp - 2  # common width of the three lane-offset taps

    # Three vertical (row-offset) views, full lane width.
    r0 = xw_ref[:, 0:Ho, :]
    r1 = xw_ref[:, 1:Ho + 1, :]
    r2 = xw_ref[:, 2:Ho + 2, :]

    # Sort each vertical 3-tap column once (6 min/max ops); shared by the three
    # horizontally adjacent windows.
    a = jnp.minimum(r0, r1)
    b = jnp.maximum(r0, r1)
    b2 = jnp.minimum(b, r2)
    hi = jnp.maximum(b, r2)
    lo = jnp.minimum(a, b2)
    mid = jnp.maximum(a, b2)

    # Horizontal combine over lane offsets 0/1/2 (lane shifts + 12 min/max ops).
    lo0, lo1, lo2 = lo[:, :, 0:Wv], lo[:, :, 1:Wv + 1], lo[:, :, 2:Wv + 2]
    mi0, mi1, mi2 = mid[:, :, 0:Wv], mid[:, :, 1:Wv + 1], mid[:, :, 2:Wv + 2]
    hi0, hi1, hi2 = hi[:, :, 0:Wv], hi[:, :, 1:Wv + 1], hi[:, :, 2:Wv + 2]

    max_lo = jnp.maximum(jnp.maximum(lo0, lo1), lo2)
    min_hi = jnp.minimum(jnp.minimum(hi0, hi1), hi2)
    med_mid = _med3(mi0, mi1, mi2)
    med = _med3(max_lo, med_mid, min_hi)

    # Last 2 lanes of the block are never valid output columns; leave them.
    o_ref[:, :, 0:Wv] = med.astype(o_ref.dtype)


def median_pool_2d(x, kernel_size=3, stride=1, padding=0, same=True):
    """x: (N, C, H, W) float array.  Returns median-pooled output (NCHW)."""
    k = _pair(kernel_size)
    s = _pair(stride)
    assert k == (3, 3) and s == (1, 1), (
        "Pallas kernel implements the module's default 3x3, stride-1 case")

    N, C, H, W = x.shape
    if same:
        p_l, p_r, p_t, p_b = _same_padding(H, W, k, s)
    else:
        p_l, p_r, p_t, p_b = _quadruple(padding)

    # Reflect pad (matches F.pad(..., mode='reflect') on the last two dims).
    xp = jnp.pad(x, ((0, 0), (0, 0), (p_t, p_b), (p_l, p_r)), mode="reflect")
    Hp, Wp = H + p_t + p_b, W + p_l + p_r
    Ho, Wo = Hp - 2, Wp - 2  # stride-1, 3x3

    NC = N * C
    xp_flat = xp.reshape(NC, Hp, Wp)
    itemsize = jnp.dtype(x.dtype).itemsize

    # ---- lane folding: put G padded images side-by-side on the lane axis ----
    LANE_TARGET = 512
    G = max(1, min(NC, LANE_TARGET // Wp))
    GWp = G * Wp
    n_groups = -(-NC // G)

    # ---- batch TB groups per grid step (target ~1 MiB input blocks) ----
    bytes_per_group = Hp * GWp * itemsize
    TARGET_BLOCK_BYTES = 1 << 20
    TB = max(1, min(n_groups, TARGET_BLOCK_BYTES // max(1, bytes_per_group)))
    n_blocks = -(-n_groups // TB)

    NCp = n_blocks * TB * G
    if NCp != NC:
        # Pad with dummy images; their outputs are discarded.  No cross-image
        # contamination: vertical taps never mix images and the lane-offset
        # taps only leak into the 2 discarded columns of each segment.
        xp_flat = jnp.pad(xp_flat, ((0, NCp - NC), (0, 0), (0, 0)))

    xw = (xp_flat.reshape(n_blocks * TB, G, Hp, Wp)
          .transpose(0, 2, 1, 3)
          .reshape(n_blocks * TB, Hp, GWp))

    out_wide = pl.pallas_call(
        _median_pool_kernel,
        out_shape=jax.ShapeDtypeStruct((n_blocks * TB, Ho, GWp), x.dtype),
        grid_spec=pltpu.PrefetchScalarGridSpec(
            num_scalar_prefetch=0,
            grid=(n_blocks,),
            in_specs=[pl.BlockSpec((TB, Hp, GWp), lambda i: (i, 0, 0))],
            out_specs=pl.BlockSpec((TB, Ho, GWp), lambda i: (i, 0, 0)),
        ),
        compiler_params=pltpu.CompilerParams(dimension_semantics=("parallel",)),
    )(xw)

    # Unfold: lane axis factors as (G, Wp); keep the first Wo columns per image.
    out = (out_wide.reshape(n_blocks * TB, Ho, G, Wp)[:, :, :, :Wo]
           .transpose(0, 2, 1, 3)
           .reshape(NCp, Ho, Wo)[:NC])
    return out.reshape(N, C, Ho, Wo)


def _reference_median_pool(x):
    """Pure-JAX reference (3x3, stride 1, same reflect padding)."""
    N, C, H, W = x.shape
    p_l, p_r, p_t, p_b = _same_padding(H, W, (3, 3), (1, 1))
    xp = jnp.pad(x, ((0, 0), (0, 0), (p_t, p_b), (p_l, p_r)), mode="reflect")
    wins = []
    for di in range(3):
        for dj in range(3):
            wins.append(xp[:, :, di:di + H, dj:dj + W])
    stacked = jnp.stack(wins, axis=-1)  # (N, C, H, W, 9)
    return jnp.median(stacked, axis=-1)  # odd count -> exact middle element


if __name__ == "__main__":
    key = jax.random.PRNGKey(0)
    x = jax.random.normal(key, (2, 4, 16, 16), dtype=jnp.float32)

    fn = jax.jit(median_pool_2d)
    out = fn(x)
    out = jax.block_until_ready(out)

    ref = _reference_median_pool(x)
    assert out.shape == (2, 4, 16, 16)
    assert jnp.allclose(out, ref, atol=1e-6, rtol=1e-6), "mismatch vs reference"
    print("KERNEL_OK")
</pallas_src>

<mosaic_0001>
module attributes {stable_mosaic.version = 11 : i64} {
  func.func @_median_pool_kernel(%arg0: i32, %arg1: memref<1x18x144xf32, #tpu.memory_space<vmem>>, %arg2: memref<1x16x144xf32, #tpu.memory_space<vmem>>) attributes {dimension_semantics = [#tpu.dimension_semantics<parallel>], iteration_bounds = array<i64: 1>, scalar_prefetch = 0 : i64, scratch_operands = 0 : i64, tpu.core_type = #tpu.core_type<tc>, window_params = [{transform_indices = @transform_0, window_bounds = array<i64: 1, 18, 144>}, {transform_indices = @transform_1, window_bounds = array<i64: 1, 16, 144>}]} {
    %c0 = arith.constant 0 : index
    %c0_0 = arith.constant 0 : index
    %c0_1 = arith.constant 0 : index
    %0 = vector.load %arg1[%c0, %c0_0, %c0_1] : memref<1x18x144xf32, #tpu.memory_space<vmem>>, vector<1x16x144xf32>
    %c0_2 = arith.constant 0 : index
    %c1 = arith.constant 1 : index
    %c0_3 = arith.constant 0 : index
    %1 = vector.load %arg1[%c0_2, %c1, %c0_3] : memref<1x18x144xf32, #tpu.memory_space<vmem>>, vector<1x16x144xf32>
    %c0_4 = arith.constant 0 : index
    %c2 = arith.constant 2 : index
    %c0_5 = arith.constant 0 : index
    %2 = vector.load %arg1[%c0_4, %c2, %c0_5] : memref<1x18x144xf32, #tpu.memory_space<vmem>>, vector<1x16x144xf32>
    %3 = arith.minimumf %0, %1 : vector<1x16x144xf32>
    %4 = arith.maximumf %0, %1 : vector<1x16x144xf32>
    %5 = arith.minimumf %4, %2 : vector<1x16x144xf32>
    %6 = arith.maximumf %4, %2 : vector<1x16x144xf32>
    %7 = arith.minimumf %3, %5 : vector<1x16x144xf32>
    %8 = arith.maximumf %3, %5 : vector<1x16x144xf32>
    %9 = vector.extract_strided_slice %7 {offsets = [0, 0, 0], sizes = [1, 16, 142], strides = [1, 1, 1]} : vector<1x16x144xf32> to vector<1x16x142xf32>
    %10 = vector.extract_strided_slice %7 {offsets = [0, 0, 1], sizes = [1, 16, 142], strides = [1, 1, 1]} : vector<1x16x144xf32> to vector<1x16x142xf32>
    %11 = vector.extract_strided_slice %7 {offsets = [0, 0, 2], sizes = [1, 16, 142], strides = [1, 1, 1]} : vector<1x16x144xf32> to vector<1x16x142xf32>
    %12 = vector.extract_strided_slice %8 {offsets = [0, 0, 0], sizes = [1, 16, 142], strides = [1, 1, 1]} : vector<1x16x144xf32> to vector<1x16x142xf32>
    %13 = vector.extract_strided_slice %8 {offsets = [0, 0, 1], sizes = [1, 16, 142], strides = [1, 1, 1]} : vector<1x16x144xf32> to vector<1x16x142xf32>
    %14 = vector.extract_strided_slice %8 {offsets = [0, 0, 2], sizes = [1, 16, 142], strides = [1, 1, 1]} : vector<1x16x144xf32> to vector<1x16x142xf32>
    %15 = vector.extract_strided_slice %6 {offsets = [0, 0, 0], sizes = [1, 16, 142], strides = [1, 1, 1]} : vector<1x16x144xf32> to vector<1x16x142xf32>
    %16 = vector.extract_strided_slice %6 {offsets = [0, 0, 1], sizes = [1, 16, 142], strides = [1, 1, 1]} : vector<1x16x144xf32> to vector<1x16x142xf32>
    %17 = vector.extract_strided_slice %6 {offsets = [0, 0, 2], sizes = [1, 16, 142], strides = [1, 1, 1]} : vector<1x16x144xf32> to vector<1x16x142xf32>
    %18 = arith.maximumf %9, %10 : vector<1x16x142xf32>
    %19 = arith.maximumf %18, %11 : vector<1x16x142xf32>
    %20 = arith.minimumf %15, %16 : vector<1x16x142xf32>
    %21 = arith.minimumf %20, %17 : vector<1x16x142xf32>
    %22 = arith.minimumf %12, %13 : vector<1x16x142xf32>
    %23 = arith.maximumf %12, %13 : vector<1x16x142xf32>
    %24 = arith.minimumf %23, %14 : vector<1x16x142xf32>
    %25 = arith.maximumf %22, %24 : vector<1x16x142xf32>
    %26 = arith.minimumf %19, %25 : vector<1x16x142xf32>
    %27 = arith.maximumf %19, %25 : vector<1x16x142xf32>
    %28 = arith.minimumf %27, %21 : vector<1x16x142xf32>
    %29 = arith.maximumf %26, %28 : vector<1x16x142xf32>
    %c0_6 = arith.constant 0 : index
    %c0_7 = arith.constant 0 : index
    %c0_8 = arith.constant 0 : index
    %30 = vector.load %arg2[%c0_6, %c0_7, %c0_8] : memref<1x16x144xf32, #tpu.memory_space<vmem>>, vector<1x16x142xf32>
    tpu.vector_store %arg2[%c0_6, %c0_7, %c0_8], %29 {strides = array<i32>} : memref<1x16x144xf32, #tpu.memory_space<vmem>>, vector<1x16x142xf32>,
    return
  }
  func.func @transform_0(%arg0: i32) -> (i32, i32, i32) {
    %c0_i32 = arith.constant 0 : i32
    %c0_i32_0 = arith.constant 0 : i32
    %c0_i32_1 = arith.constant 0 : i32
    return %arg0, %c0_i32, %c0_i32_0 : i32, i32, i32
  }
  func.func @transform_1(%arg0: i32) -> (i32, i32, i32) {
    %c0_i32 = arith.constant 0 : i32
    %c0_i32_0 = arith.constant 0 : i32
    %c0_i32_1 = arith.constant 0 : i32
    return %arg0, %c0_i32, %c0_i32_0 : i32, i32, i32
  }
}

</mosaic_0001>

<llo_original>
// kernel: median_pool_2d.1
$region0: #{median_pool_2d.1}
  #allocation0 [shape = 'u32[]', space=smem, size = 0x4, offset = 0x4, fixed_abs, tag = 'smem constant byte address 0x4 - core index']
  #allocation1 [shape = 'u32[144,128]{1,0:T(1,128)}', space=vmem, size = 0x12000, scoped, tag = 'internal scratch']
  %s0 = inlined_call_operand.vmem [shape: f32[1,18,144], index: 0, kind: input, shape index: {}]
  %s1 = inlined_call_operand.vmem [shape: f32[1,16,144], index: 1, kind: output, shape index: {}]
  %s2 = sld [smem:[#allocation0]]
  $region14: #{median_pool_2d.1} parent=0
    _
  %s4 = ssub.s32 1, %s2
  %s5 = scalar_select 0, %s4, %s2
  // Predicated region
  $region2: #{median_pool_2d.1} parent=0 // pred_check
    _
  $region3: #{median_pool_2d.1} parent=0 // pred_check_branch
    %7 = sbr.rel (0) target = $region5
  $region4: #{median_pool_2d.1} parent=0 // pred_region
    _
  $region5: #{median_pool_2d.1} parent=0 // pred_fallthru
    _
  %v8 = vld [vmem:[%s0] sm:$0xff]
  %v9 = vld [vmem:[%s0 + $0x8] sm:$0xff]
  %v10 = vld [vmem:[%s0 + $0x10] sm:$0xff]
  %v11 = vld [vmem:[%s0 + $0x18] sm:$0xff]
  %v12 = vld [vmem:[%s0] sm:$0xfe]
  %v13 = vld [vmem:[%s0 + $0x8] sm:$0xfe]
  %v14 = vld [vmem:[%s0 + $0x20] sm:$0x1]
  %v15 = vld [vmem:[%s0 + $0x28] sm:$0x1]
  %v16 = vld [vmem:[%s0] sm:$0xfc]
  %v17 = vld [vmem:[%s0 + $0x8] sm:$0xfc]
  %v18 = vld [vmem:[%s0 + $0x20] sm:$0x3]
  %v19 = vld [vmem:[%s0 + $0x28] sm:$0x3]
  %vm26 = vcmask 1046528
  %v27 = vrot.slane %v12, 1
  %v28 = vrot.slane %v10, 1
  %v29 = vsel %vm26, %v27, %v28
  %v30 = vrot.slane %v13, 1
  %v31 = vrot.slane %v11, 1
  %v32 = vsel %vm26, %v30, %v31
  %v33 = vrot.slane %v14, 1
  %v34 = vsel %vm26, %v28, %v33
  %v35 = vrot.slane %v15, 1
  %v36 = vsel %vm26, %v31, %v35
  %v41 = vmin.f32 %v8, %v29
  %v42 = vmin.f32 %v9, %v32
  %v43 = vmin.f32 %v10, %v34
  %v44 = vmin.f32 %v11, %v36
  %v45 = vmax.f32 %v8, %v29
  %v46 = vmax.f32 %v9, %v32
  %v47 = vmax.f32 %v10, %v34
  %v48 = vmax.f32 %v11, %v36
  %vm53 = vcmask 1045504
  %v54 = vrot.slane %v16, 2
  %v55 = vrot.slane %v10, 2
  %v56 = vsel %vm53, %v54, %v55
  %v57 = vrot.slane %v17, 2
  %v58 = vrot.slane %v11, 2
  %v59 = vsel %vm53, %v57, %v58
  %v60 = vrot.slane %v18, 2
  %v61 = vsel %vm53, %v55, %v60
  %v62 = vrot.slane %v19, 2
  %v63 = vsel %vm53, %v58, %v62
  %v68 = vmin.f32 %v45, %v56
  %v69 = vmin.f32 %v46, %v59
  %v70 = vmin.f32 %v47, %v61
  %v71 = vmin.f32 %v48, %v63
  %v72 = vmax.f32 %v45, %v56
  %v73 = vmax.f32 %v46, %v59
  %v74 = vmax.f32 %v47, %v61
  %v75 = vmax.f32 %v48, %v63
  %v76 = vmin.f32 %v41, %v68
  %v77 = vmin.f32 %v42, %v69
  %v78 = vmin.f32 %v43, %v70
  %v79 = vmin.f32 %v44, %v71
  %v80 = vmax.f32 %v41, %v68
  %v81 = vmax.f32 %v42, %v69
  %v82 = vmax.f32 %v43, %v70
  %v83 = vmax.f32 %v44, %v71
  %88 = vrot.lane.b32.xlu0 %v76, 127
  %v89 = vpop.permute.xlu0 %88
  %90 = vrot.lane.b32.xlu0 %v77, 127
  %v91 = vpop.permute.xlu0 %90
  %92 = vrot.lane.b32.xlu0 %v78, 127
  %v93 = vpop.permute.xlu0 %92
  %94 = vrot.lane.b32.xlu0 %v79, 127
  %v95 = vpop.permute.xlu0 %94
  %vm96 = vcmask 1039360
  %v97 = vsel %vm96, %v89, %v91
  %v98 = vsel %vm96, %v93, %v95
  %v103 = vmax.f32 %v76, %v97
  %v104 = vmax.f32 %v77, %v91
  %v105 = vmax.f32 %v78, %v98
  %v106 = vmax.f32 %v79, %v95
  %107 = vrot.lane.b32.xlu0 %v76, 126
  %v108 = vpop.permute.xlu0 %107
  %109 = vrot.lane.b32.xlu0 %v77, 126
  %v110 = vpop.permute.xlu0 %109
  %111 = vrot.lane.b32.xlu0 %v78, 126
  %v112 = vpop.permute.xlu0 %111
  %113 = vrot.lane.b32.xlu0 %v79, 126
  %v114 = vpop.permute.xlu0 %113
  %vm115 = vcmask 1031168
  %v116 = vsel %vm115, %v108, %v110
  %v117 = vsel %vm115, %v112, %v114
  %v122 = vmax.f32 %v103, %v116
  %v123 = vmax.f32 %v104, %v110
  %v124 = vmax.f32 %v105, %v117
  %v125 = vmax.f32 %v106, %v114
  %130 = vrot.lane.b32.xlu0 %v72, 127
  %v131 = vpop.permute.xlu0 %130
  %132 = vrot.lane.b32.xlu0 %v73, 127
  %v133 = vpop.permute.xlu0 %132
  %134 = vrot.lane.b32.xlu0 %v74, 127
  %v135 = vpop.permute.xlu0 %134
  %136 = vrot.lane.b32.xlu0 %v75, 127
  %v137 = vpop.permute.xlu0 %136
  %v138 = vsel %vm96, %v131, %v133
  %v139 = vsel %vm96, %v135, %v137
  %v144 = vmin.f32 %v72, %v138
  %v145 = vmin.f32 %v73, %v133
  %v146 = vmin.f32 %v74, %v139
  %v147 = vmin.f32 %v75, %v137
  %148 = vrot.lane.b32.xlu0 %v72, 126
  %v149 = vpop.permute.xlu0 %148
  %150 = vrot.lane.b32.xlu0 %v73, 126
  %v151 = vpop.permute.xlu0 %150
  %152 = vrot.lane.b32.xlu0 %v74, 126
  %v153 = vpop.permute.xlu0 %152
  %154 = vrot.lane.b32.xlu0 %v75, 126
  %v155 = vpop.permute.xlu0 %154
  %v156 = vsel %vm115, %v149, %v151
  %v157 = vsel %vm115, %v153, %v155
  %v162 = vmin.f32 %v144, %v156
  %v163 = vmin.f32 %v145, %v151
  %v164 = vmin.f32 %v146, %v157
  %v165 = vmin.f32 %v147, %v155
  %170 = vrot.lane.b32.xlu0 %v80, 127
  %v171 = vpop.permute.xlu0 %170
  %172 = vrot.lane.b32.xlu0 %v81, 127
  %v173 = vpop.permute.xlu0 %172
  %174 = vrot.lane.b32.xlu0 %v82, 127
  %v175 = vpop.permute.xlu0 %174
  %176 = vrot.lane.b32.xlu0 %v83, 127
  %v177 = vpop.permute.xlu0 %176
  %v178 = vsel %vm96, %v171, %v173
  %v179 = vsel %vm96, %v175, %v177
  %v184 = vmin.f32 %v80, %v178
  %v185 = vmin.f32 %v81, %v173
  %v186 = vmin.f32 %v82, %v179
  %v187 = vmin.f32 %v83, %v177
  %v188 = vmax.f32 %v80, %v178
  %v189 = vmax.f32 %v81, %v173
  %v190 = vmax.f32 %v82, %v179
  %v191 = vmax.f32 %v83, %v177
  %192 = vrot.lane.b32.xlu0 %v80, 126
  %v193 = vpop.permute.xlu0 %192
  %194 = vrot.lane.b32.xlu0 %v81, 126
  %v195 = vpop.permute.xlu0 %194
  %196 = vrot.lane.b32.xlu0 %v82, 126
  %v197 = vpop.permute.xlu0 %196
  %198 = vrot.lane.b32.xlu0 %v83, 126
  %v199 = vpop.permute.xlu0 %198
  %v200 = vsel %vm115, %v193, %v195
  %v201 = vsel %vm115, %v197, %v199
  %v206 = vmin.f32 %v188, %v200
  %v207 = vmin.f32 %v189, %v195
  %v208 = vmin.f32 %v190, %v201
  %v209 = vmin.f32 %v191, %v199
  %v210 = vmax.f32 %v184, %v206
  %v211 = vmax.f32 %v185, %v207
  %v212 = vmax.f32 %v186, %v208
  %v213 = vmax.f32 %v187, %v209
  %v214 = vmin.f32 %v122, %v210
  %v215 = vmin.f32 %v123, %v211
  %v216 = vmin.f32 %v124, %v212
  %v217 = vmin.f32 %v125, %v213
  %v218 = vmax.f32 %v122, %v210
  %v219 = vmax.f32 %v123, %v211
  %v220 = vmax.f32 %v124, %v212
  %v221 = vmax.f32 %v125, %v213
  %v222 = vmin.f32 %v218, %v162
  %v223 = vmin.f32 %v219, %v163
  %v224 = vmin.f32 %v220, %v164
  %v225 = vmin.f32 %v221, %v165
  %v226 = vmax.f32 %v214, %v222
  %v227 = vmax.f32 %v215, %v223
  %v228 = vmax.f32 %v216, %v224
  %v229 = vmax.f32 %v217, %v225
  %230 = vst [vmem:[%s1] sm:$0xff] %v226
  %vm231 = vcmask 113664
  %232 = vst.msk [vmem:[%s1 + $0x8] sm:$0xff] %vm231, %v227
  %233 = vst [vmem:[%s1 + $0x10] sm:$0xff] %v228
  %234 = vst.msk [vmem:[%s1 + $0x18] sm:$0xff] %vm231, %v229
  // Predicated region
  $region6: #{median_pool_2d.1} parent=0 // pred_check
    _
  $region7: #{median_pool_2d.1} parent=0 // pred_check_branch
    %236 = sbr.rel (0) target = $region9
  $region8: #{median_pool_2d.1} parent=0 // pred_region
    _
  $region9: #{median_pool_2d.1} parent=0 // pred_fallthru
    _
  // Predicated region
  $region10: #{median_pool_2d.1} parent=0 // pred_check
    _
  $region11: #{median_pool_2d.1} parent=0 // pred_check_branch
    %238 = sbr.rel (0) target = $region13
  $region12: #{median_pool_2d.1} parent=0 // pred_region
    _
  $region13: #{median_pool_2d.1} parent=0 // pred_fallthru
    _

</llo_original>
